<compile_context>
chip_gen: v7x
topology: tpu7x:2x2x1
jax: 0.10.0
libtpu: 0.0.40
codegen_flags: <defaults>
</compile_context>

<pallas_src>
import functools

import jax
import jax.numpy as jnp
from jax import lax
from jax.experimental import pallas as pl
from jax.experimental.pallas import tpu as pltpu


def _sigmoid(z):
    # sigmoid(z) == 0.5 * tanh(0.5 * z) + 0.5 : one EUP push (tanh) + 2 cheap VALU ops.
    return 0.5 * jnp.tanh(0.5 * z) + 0.5


def mlp_kernel(x_ref, w1_ref, b1_ref, w2_ref, b2_ref, w3_ref, b3_ref, o_ref,
               *, n_chunks, chunk_rows):
    # x_ref block: (8, R, 128) -- feature on the leading axis, batch packed into
    # (sublane, lane). o_ref block: (R, 128). Iterate over chunk_rows-sublane chunks
    # so every intermediate is a single dense vreg and live ranges stay bounded.
    def chunk(c, carry):
        r0 = pl.multiple_of(c * chunk_rows, chunk_rows)
        sl = pl.ds(r0, chunk_rows)

        # Layer 1: 8 -> 6. Stream x rows (k outermost), accumulate into 6 accumulators.
        h1 = [None] * 6
        for k in range(8):
            xk = x_ref[k, sl, :]                       # (chunk_rows, 128)
            for j in range(6):
                t = xk * w1_ref[k, j]
                h1[j] = t if k == 0 else h1[j] + t
        h1 = [_sigmoid(h1[j] + b1_ref[j]) for j in range(6)]

        # Layer 2: 6 -> 4.
        h2 = [None] * 4
        for k in range(6):
            for j in range(4):
                t = h1[k] * w2_ref[k, j]
                h2[j] = t if k == 0 else h2[j] + t
        h2 = [_sigmoid(h2[j] + b2_ref[j]) for j in range(4)]

        # Layer 3: 4 -> 1, dense (chunk_rows, 128) store.
        acc = h2[0] * w3_ref[0, 0]
        for k in range(1, 4):
            acc = acc + h2[k] * w3_ref[k, 0]
        o_ref[sl, :] = _sigmoid(acc + b3_ref[0])
        return carry

    # Full unroll for short chunk counts; partial unroll keeps code size / compile
    # time sane for big blocks while still giving the LLO scheduler visibility.
    unroll = n_chunks if n_chunks <= 8 else 8
    lax.fori_loop(0, n_chunks, chunk, 0, unroll=unroll)


def mlp_forward(x, w1, b1, w2, b2, w3, b3, block_rows=256, chunk_rows=8):
    """x: (N, 8) float32. Returns (N, 1), matching the PyTorch module."""
    n = x.shape[0]
    assert x.shape[1] == 8
    assert chunk_rows % 8 == 0

    # How many (sublane-row, 128-lane) rows of batch we need, rounded so the
    # block tiles evenly into chunk_rows-sized chunks and the grid tiles evenly.
    rows = pl.cdiv(n, 128)
    rows = pl.cdiv(rows, chunk_rows) * chunk_rows
    block_rows = max(chunk_rows, min(block_rows, rows))
    block_rows = (block_rows // chunk_rows) * chunk_rows
    total_rows = pl.cdiv(rows, block_rows) * block_rows
    n_pad = total_rows * 128

    # Batch on lanes, then fold into (8, total_rows, 128) so all 8 sublanes are used.
    # TODO(synk): the transpose+pad is a standalone HBM->HBM XLA op; at large N the
    # upstream producer should emit the (8, N) layout directly.
    xt = jnp.pad(x.T, ((0, 0), (0, n_pad - n))).reshape(8, total_rows, 128)

    n_chunks = block_rows // chunk_rows
    kernel = functools.partial(mlp_kernel, n_chunks=n_chunks, chunk_rows=chunk_rows)

    smem = pl.BlockSpec(memory_space=pltpu.MemorySpace.SMEM)  # whole array, scalar path
    out = pl.pallas_call(
        kernel,
        out_shape=jax.ShapeDtypeStruct((total_rows, 128), jnp.float32),
        grid=(total_rows // block_rows,),
        in_specs=[
            pl.BlockSpec((8, block_rows, 128), lambda i: (0, i, 0)),  # dense batch tile
            smem, smem,  # w1 (8,6), b1 (6,)
            smem, smem,  # w2 (6,4), b2 (4,)
            smem, smem,  # w3 (4,1), b3 (1,)
        ],
        out_specs=pl.BlockSpec((block_rows, 128), lambda i: (i, 0)),
        compiler_params=pltpu.CompilerParams(
            dimension_semantics=("parallel",)),  # megacore sharding on v7x
    )(xt, w1, b1, w2, b2, w3, b3)

    # Element [r, l] is the output for batch index r*128 + l.
    return out.reshape(-1)[:n].reshape(n, 1)


def init_params(key):
    # Deterministic init mimicking torch.nn.Linear default (uniform +/- 1/sqrt(fan_in)).
    # Weights stored (in, out); biases 1-D (out,).
    dims = [(8, 6), (6, 4), (4, 1)]
    params = []
    for i, (fan_in, fan_out) in enumerate(dims):
        kw, kb = jax.random.split(jax.random.fold_in(key, i))
        bound = 1.0 / jnp.sqrt(fan_in)
        w = jax.random.uniform(kw, (fan_in, fan_out), jnp.float32, -bound, bound)
        b = jax.random.uniform(kb, (fan_out,), jnp.float32, -bound, bound)
        params += [w, b]
    return params


def _reference(x, w1, b1, w2, b2, w3, b3):
    h = jax.nn.sigmoid(x @ w1 + b1)
    h = jax.nn.sigmoid(h @ w2 + b2)
    return jax.nn.sigmoid(h @ w3 + b3)


if __name__ == "__main__":
    key = jax.random.PRNGKey(0)
    kx, kx2, kp = jax.random.split(key, 3)
    w1, b1, w2, b2, w3, b3 = init_params(kp)

    # Small batch, deliberately not a multiple of 128 (exercises padding + clamped block).
    n = 300
    x = jax.random.normal(kx, (n, 8), dtype=jnp.float32)
    out = jax.block_until_ready(mlp_forward(x, w1, b1, w2, b2, w3, b3))
    ref = _reference(x, w1, b1, w2, b2, w3, b3)
    assert out.shape == (n, 1)
    assert jnp.allclose(out, ref, atol=1e-5), "mismatch vs reference (small batch)"

    # Larger batch: exercises the multi-chunk inner loop and a multi-step grid.
    n2 = 33000
    x2 = jax.random.normal(kx2, (n2, 8), dtype=jnp.float32)
    out2 = jax.block_until_ready(mlp_forward(x2, w1, b1, w2, b2, w3, b3))
    ref2 = _reference(x2, w1, b1, w2, b2, w3, b3)
    assert out2.shape == (n2, 1)
    assert jnp.allclose(out2, ref2, atol=1e-5), "mismatch vs reference (large batch)"

    print("KERNEL_OK")
</pallas_src>

<mosaic_0001>
module attributes {stable_mosaic.version = 11 : i64} {
  func.func @mlp_kernel(%arg0: i32, %arg1: memref<8x8x128xf32, #tpu.memory_space<vmem>>, %arg2: memref<8x6xf32, #tpu.memory_space<smem>>, %arg3: memref<6xf32, #tpu.memory_space<smem>>, %arg4: memref<6x4xf32, #tpu.memory_space<smem>>, %arg5: memref<4xf32, #tpu.memory_space<smem>>, %arg6: memref<4x1xf32, #tpu.memory_space<smem>>, %arg7: memref<1xf32, #tpu.memory_space<smem>>, %arg8: memref<8x128xf32, #tpu.memory_space<vmem>>) attributes {dimension_semantics = [#tpu.dimension_semantics<parallel>], iteration_bounds = array<i64: 1>, scalar_prefetch = 0 : i64, scratch_operands = 0 : i64, tpu.core_type = #tpu.core_type<tc>, window_params = [{transform_indices = @transform_0, window_bounds = array<i64: 8, 8, 128>}, {transform_indices = @transform_1, window_bounds = array<i64: 8, 6>}, {transform_indices = @transform_2, window_bounds = array<i64: 6>}, {transform_indices = @transform_3, window_bounds = array<i64: 6, 4>}, {transform_indices = @transform_4, window_bounds = array<i64: 4>}, {transform_indices = @transform_5, window_bounds = array<i64: 4, 1>}, {transform_indices = @transform_6, window_bounds = array<i64: 1>}, {transform_indices = @transform_7, window_bounds = array<i64: 8, 128>}]} {
    %c0_i32 = arith.constant 0 : i32
    %c8_i32 = arith.constant 8 : i32
    %0 = arith.muli %c0_i32, %c8_i32 : i32
    %1 = tpu.assume_multiple %0, 8 : i32
    %c0 = arith.constant 0 : index
    %2 = arith.index_cast %1 : i32 to index
    %c0_0 = arith.constant 0 : index
    %3 = vector.load %arg1[%c0, %2, %c0_0] : memref<8x8x128xf32, #tpu.memory_space<vmem>>, vector<1x8x128xf32>
    %4 = vector.shape_cast %3 : vector<1x8x128xf32> to vector<8x128xf32>
    %c0_1 = arith.constant 0 : index
    %c0_2 = arith.constant 0 : index
    %5 = memref.load %arg2[%c0_1, %c0_2] : memref<8x6xf32, #tpu.memory_space<smem>>
    %6 = vector.broadcast %5 : f32 to vector<8x128xf32>
    %7 = arith.mulf %4, %6 : vector<8x128xf32>
    %c0_3 = arith.constant 0 : index
    %c1 = arith.constant 1 : index
    %8 = memref.load %arg2[%c0_3, %c1] : memref<8x6xf32, #tpu.memory_space<smem>>
    %9 = vector.broadcast %8 : f32 to vector<8x128xf32>
    %10 = arith.mulf %4, %9 : vector<8x128xf32>
    %c0_4 = arith.constant 0 : index
    %c2 = arith.constant 2 : index
    %11 = memref.load %arg2[%c0_4, %c2] : memref<8x6xf32, #tpu.memory_space<smem>>
    %12 = vector.broadcast %11 : f32 to vector<8x128xf32>
    %13 = arith.mulf %4, %12 : vector<8x128xf32>
    %c0_5 = arith.constant 0 : index
    %c3 = arith.constant 3 : index
    %14 = memref.load %arg2[%c0_5, %c3] : memref<8x6xf32, #tpu.memory_space<smem>>
    %15 = vector.broadcast %14 : f32 to vector<8x128xf32>
    %16 = arith.mulf %4, %15 : vector<8x128xf32>
    %c0_6 = arith.constant 0 : index
    %c4 = arith.constant 4 : index
    %17 = memref.load %arg2[%c0_6, %c4] : memref<8x6xf32, #tpu.memory_space<smem>>
    %18 = vector.broadcast %17 : f32 to vector<8x128xf32>
    %19 = arith.mulf %4, %18 : vector<8x128xf32>
    %c0_7 = arith.constant 0 : index
    %c5 = arith.constant 5 : index
    %20 = memref.load %arg2[%c0_7, %c5] : memref<8x6xf32, #tpu.memory_space<smem>>
    %21 = vector.broadcast %20 : f32 to vector<8x128xf32>
    %22 = arith.mulf %4, %21 : vector<8x128xf32>
    %c1_8 = arith.constant 1 : index
    %23 = arith.index_cast %1 : i32 to index
    %c0_9 = arith.constant 0 : index
    %24 = vector.load %arg1[%c1_8, %23, %c0_9] : memref<8x8x128xf32, #tpu.memory_space<vmem>>, vector<1x8x128xf32>
    %25 = vector.shape_cast %24 : vector<1x8x128xf32> to vector<8x128xf32>
    %c1_10 = arith.constant 1 : index
    %c0_11 = arith.constant 0 : index
    %26 = memref.load %arg2[%c1_10, %c0_11] : memref<8x6xf32, #tpu.memory_space<smem>>
    %27 = vector.broadcast %26 : f32 to vector<8x128xf32>
    %28 = arith.mulf %25, %27 : vector<8x128xf32>
    %29 = arith.addf %7, %28 : vector<8x128xf32>
    %c1_12 = arith.constant 1 : index
    %c1_13 = arith.constant 1 : index
    %30 = memref.load %arg2[%c1_12, %c1_13] : memref<8x6xf32, #tpu.memory_space<smem>>
    %31 = vector.broadcast %30 : f32 to vector<8x128xf32>
    %32 = arith.mulf %25, %31 : vector<8x128xf32>
    %33 = arith.addf %10, %32 : vector<8x128xf32>
    %c1_14 = arith.constant 1 : index
    %c2_15 = arith.constant 2 : index
    %34 = memref.load %arg2[%c1_14, %c2_15] : memref<8x6xf32, #tpu.memory_space<smem>>
    %35 = vector.broadcast %34 : f32 to vector<8x128xf32>
    %36 = arith.mulf %25, %35 : vector<8x128xf32>
    %37 = arith.addf %13, %36 : vector<8x128xf32>
    %c1_16 = arith.constant 1 : index
    %c3_17 = arith.constant 3 : index
    %38 = memref.load %arg2[%c1_16, %c3_17] : memref<8x6xf32, #tpu.memory_space<smem>>
    %39 = vector.broadcast %38 : f32 to vector<8x128xf32>
    %40 = arith.mulf %25, %39 : vector<8x128xf32>
    %41 = arith.addf %16, %40 : vector<8x128xf32>
    %c1_18 = arith.constant 1 : index
    %c4_19 = arith.constant 4 : index
    %42 = memref.load %arg2[%c1_18, %c4_19] : memref<8x6xf32, #tpu.memory_space<smem>>
    %43 = vector.broadcast %42 : f32 to vector<8x128xf32>
    %44 = arith.mulf %25, %43 : vector<8x128xf32>
    %45 = arith.addf %19, %44 : vector<8x128xf32>
    %c1_20 = arith.constant 1 : index
    %c5_21 = arith.constant 5 : index
    %46 = memref.load %arg2[%c1_20, %c5_21] : memref<8x6xf32, #tpu.memory_space<smem>>
    %47 = vector.broadcast %46 : f32 to vector<8x128xf32>
    %48 = arith.mulf %25, %47 : vector<8x128xf32>
    %49 = arith.addf %22, %48 : vector<8x128xf32>
    %c2_22 = arith.constant 2 : index
    %50 = arith.index_cast %1 : i32 to index
    %c0_23 = arith.constant 0 : index
    %51 = vector.load %arg1[%c2_22, %50, %c0_23] : memref<8x8x128xf32, #tpu.memory_space<vmem>>, vector<1x8x128xf32>
    %52 = vector.shape_cast %51 : vector<1x8x128xf32> to vector<8x128xf32>
    %c2_24 = arith.constant 2 : index
    %c0_25 = arith.constant 0 : index
    %53 = memref.load %arg2[%c2_24, %c0_25] : memref<8x6xf32, #tpu.memory_space<smem>>
    %54 = vector.broadcast %53 : f32 to vector<8x128xf32>
    %55 = arith.mulf %52, %54 : vector<8x128xf32>
    %56 = arith.addf %29, %55 : vector<8x128xf32>
    %c2_26 = arith.constant 2 : index
    %c1_27 = arith.constant 1 : index
    %57 = memref.load %arg2[%c2_26, %c1_27] : memref<8x6xf32, #tpu.memory_space<smem>>
    %58 = vector.broadcast %57 : f32 to vector<8x128xf32>
    %59 = arith.mulf %52, %58 : vector<8x128xf32>
    %60 = arith.addf %33, %59 : vector<8x128xf32>
    %c2_28 = arith.constant 2 : index
    %c2_29 = arith.constant 2 : index
    %61 = memref.load %arg2[%c2_28, %c2_29] : memref<8x6xf32, #tpu.memory_space<smem>>
    %62 = vector.broadcast %61 : f32 to vector<8x128xf32>
    %63 = arith.mulf %52, %62 : vector<8x128xf32>
    %64 = arith.addf %37, %63 : vector<8x128xf32>
    %c2_30 = arith.constant 2 : index
    %c3_31 = arith.constant 3 : index
    %65 = memref.load %arg2[%c2_30, %c3_31] : memref<8x6xf32, #tpu.memory_space<smem>>
    %66 = vector.broadcast %65 : f32 to vector<8x128xf32>
    %67 = arith.mulf %52, %66 : vector<8x128xf32>
    %68 = arith.addf %41, %67 : vector<8x128xf32>
    %c2_32 = arith.constant 2 : index
    %c4_33 = arith.constant 4 : index
    %69 = memref.load %arg2[%c2_32, %c4_33] : memref<8x6xf32, #tpu.memory_space<smem>>
    %70 = vector.broadcast %69 : f32 to vector<8x128xf32>
    %71 = arith.mulf %52, %70 : vector<8x128xf32>
    %72 = arith.addf %45, %71 : vector<8x128xf32>
    %c2_34 = arith.constant 2 : index
    %c5_35 = arith.constant 5 : index
    %73 = memref.load %arg2[%c2_34, %c5_35] : memref<8x6xf32, #tpu.memory_space<smem>>
    %74 = vector.broadcast %73 : f32 to vector<8x128xf32>
    %75 = arith.mulf %52, %74 : vector<8x128xf32>
    %76 = arith.addf %49, %75 : vector<8x128xf32>
    %c3_36 = arith.constant 3 : index
    %77 = arith.index_cast %1 : i32 to index
    %c0_37 = arith.constant 0 : index
    %78 = vector.load %arg1[%c3_36, %77, %c0_37] : memref<8x8x128xf32, #tpu.memory_space<vmem>>, vector<1x8x128xf32>
    %79 = vector.shape_cast %78 : vector<1x8x128xf32> to vector<8x128xf32>
    %c3_38 = arith.constant 3 : index
    %c0_39 = arith.constant 0 : index
    %80 = memref.load %arg2[%c3_38, %c0_39] : memref<8x6xf32, #tpu.memory_space<smem>>
    %81 = vector.broadcast %80 : f32 to vector<8x128xf32>
    %82 = arith.mulf %79, %81 : vector<8x128xf32>
    %83 = arith.addf %56, %82 : vector<8x128xf32>
    %c3_40 = arith.constant 3 : index
    %c1_41 = arith.constant 1 : index
    %84 = memref.load %arg2[%c3_40, %c1_41] : memref<8x6xf32, #tpu.memory_space<smem>>
    %85 = vector.broadcast %84 : f32 to vector<8x128xf32>
    %86 = arith.mulf %79, %85 : vector<8x128xf32>
    %87 = arith.addf %60, %86 : vector<8x128xf32>
    %c3_42 = arith.constant 3 : index
    %c2_43 = arith.constant 2 : index
    %88 = memref.load %arg2[%c3_42, %c2_43] : memref<8x6xf32, #tpu.memory_space<smem>>
    %89 = vector.broadcast %88 : f32 to vector<8x128xf32>
    %90 = arith.mulf %79, %89 : vector<8x128xf32>
    %91 = arith.addf %64, %90 : vector<8x128xf32>
    %c3_44 = arith.constant 3 : index
    %c3_45 = arith.constant 3 : index
    %92 = memref.load %arg2[%c3_44, %c3_45] : memref<8x6xf32, #tpu.memory_space<smem>>
    %93 = vector.broadcast %92 : f32 to vector<8x128xf32>
    %94 = arith.mulf %79, %93 : vector<8x128xf32>
    %95 = arith.addf %68, %94 : vector<8x128xf32>
    %c3_46 = arith.constant 3 : index
    %c4_47 = arith.constant 4 : index
    %96 = memref.load %arg2[%c3_46, %c4_47] : memref<8x6xf32, #tpu.memory_space<smem>>
    %97 = vector.broadcast %96 : f32 to vector<8x128xf32>
    %98 = arith.mulf %79, %97 : vector<8x128xf32>
    %99 = arith.addf %72, %98 : vector<8x128xf32>
    %c3_48 = arith.constant 3 : index
    %c5_49 = arith.constant 5 : index
    %100 = memref.load %arg2[%c3_48, %c5_49] : memref<8x6xf32, #tpu.memory_space<smem>>
    %101 = vector.broadcast %100 : f32 to vector<8x128xf32>
    %102 = arith.mulf %79, %101 : vector<8x128xf32>
    %103 = arith.addf %76, %102 : vector<8x128xf32>
    %c4_50 = arith.constant 4 : index
    %104 = arith.index_cast %1 : i32 to index
    %c0_51 = arith.constant 0 : index
    %105 = vector.load %arg1[%c4_50, %104, %c0_51] : memref<8x8x128xf32, #tpu.memory_space<vmem>>, vector<1x8x128xf32>
    %106 = vector.shape_cast %105 : vector<1x8x128xf32> to vector<8x128xf32>
    %c4_52 = arith.constant 4 : index
    %c0_53 = arith.constant 0 : index
    %107 = memref.load %arg2[%c4_52, %c0_53] : memref<8x6xf32, #tpu.memory_space<smem>>
    %108 = vector.broadcast %107 : f32 to vector<8x128xf32>
    %109 = arith.mulf %106, %108 : vector<8x128xf32>
    %110 = arith.addf %83, %109 : vector<8x128xf32>
    %c4_54 = arith.constant 4 : index
    %c1_55 = arith.constant 1 : index
    %111 = memref.load %arg2[%c4_54, %c1_55] : memref<8x6xf32, #tpu.memory_space<smem>>
    %112 = vector.broadcast %111 : f32 to vector<8x128xf32>
    %113 = arith.mulf %106, %112 : vector<8x128xf32>
    %114 = arith.addf %87, %113 : vector<8x128xf32>
    %c4_56 = arith.constant 4 : index
    %c2_57 = arith.constant 2 : index
    %115 = memref.load %arg2[%c4_56, %c2_57] : memref<8x6xf32, #tpu.memory_space<smem>>
    %116 = vector.broadcast %115 : f32 to vector<8x128xf32>
    %117 = arith.mulf %106, %116 : vector<8x128xf32>
    %118 = arith.addf %91, %117 : vector<8x128xf32>
    %c4_58 = arith.constant 4 : index
    %c3_59 = arith.constant 3 : index
    %119 = memref.load %arg2[%c4_58, %c3_59] : memref<8x6xf32, #tpu.memory_space<smem>>
    %120 = vector.broadcast %119 : f32 to vector<8x128xf32>
    %121 = arith.mulf %106, %120 : vector<8x128xf32>
    %122 = arith.addf %95, %121 : vector<8x128xf32>
    %c4_60 = arith.constant 4 : index
    %c4_61 = arith.constant 4 : index
    %123 = memref.load %arg2[%c4_60, %c4_61] : memref<8x6xf32, #tpu.memory_space<smem>>
    %124 = vector.broadcast %123 : f32 to vector<8x128xf32>
    %125 = arith.mulf %106, %124 : vector<8x128xf32>
    %126 = arith.addf %99, %125 : vector<8x128xf32>
    %c4_62 = arith.constant 4 : index
    %c5_63 = arith.constant 5 : index
    %127 = memref.load %arg2[%c4_62, %c5_63] : memref<8x6xf32, #tpu.memory_space<smem>>
    %128 = vector.broadcast %127 : f32 to vector<8x128xf32>
    %129 = arith.mulf %106, %128 : vector<8x128xf32>
    %130 = arith.addf %103, %129 : vector<8x128xf32>
    %c5_64 = arith.constant 5 : index
    %131 = arith.index_cast %1 : i32 to index
    %c0_65 = arith.constant 0 : index
    %132 = vector.load %arg1[%c5_64, %131, %c0_65] : memref<8x8x128xf32, #tpu.memory_space<vmem>>, vector<1x8x128xf32>
    %133 = vector.shape_cast %132 : vector<1x8x128xf32> to vector<8x128xf32>
    %c5_66 = arith.constant 5 : index
    %c0_67 = arith.constant 0 : index
    %134 = memref.load %arg2[%c5_66, %c0_67] : memref<8x6xf32, #tpu.memory_space<smem>>
    %135 = vector.broadcast %134 : f32 to vector<8x128xf32>
    %136 = arith.mulf %133, %135 : vector<8x128xf32>
    %137 = arith.addf %110, %136 : vector<8x128xf32>
    %c5_68 = arith.constant 5 : index
    %c1_69 = arith.constant 1 : index
    %138 = memref.load %arg2[%c5_68, %c1_69] : memref<8x6xf32, #tpu.memory_space<smem>>
    %139 = vector.broadcast %138 : f32 to vector<8x128xf32>
    %140 = arith.mulf %133, %139 : vector<8x128xf32>
    %141 = arith.addf %114, %140 : vector<8x128xf32>
    %c5_70 = arith.constant 5 : index
    %c2_71 = arith.constant 2 : index
    %142 = memref.load %arg2[%c5_70, %c2_71] : memref<8x6xf32, #tpu.memory_space<smem>>
    %143 = vector.broadcast %142 : f32 to vector<8x128xf32>
    %144 = arith.mulf %133, %143 : vector<8x128xf32>
    %145 = arith.addf %118, %144 : vector<8x128xf32>
    %c5_72 = arith.constant 5 : index
    %c3_73 = arith.constant 3 : index
    %146 = memref.load %arg2[%c5_72, %c3_73] : memref<8x6xf32, #tpu.memory_space<smem>>
    %147 = vector.broadcast %146 : f32 to vector<8x128xf32>
    %148 = arith.mulf %133, %147 : vector<8x128xf32>
    %149 = arith.addf %122, %148 : vector<8x128xf32>
    %c5_74 = arith.constant 5 : index
    %c4_75 = arith.constant 4 : index
    %150 = memref.load %arg2[%c5_74, %c4_75] : memref<8x6xf32, #tpu.memory_space<smem>>
    %151 = vector.broadcast %150 : f32 to vector<8x128xf32>
    %152 = arith.mulf %133, %151 : vector<8x128xf32>
    %153 = arith.addf %126, %152 : vector<8x128xf32>
    %c5_76 = arith.constant 5 : index
    %c5_77 = arith.constant 5 : index
    %154 = memref.load %arg2[%c5_76, %c5_77] : memref<8x6xf32, #tpu.memory_space<smem>>
    %155 = vector.broadcast %154 : f32 to vector<8x128xf32>
    %156 = arith.mulf %133, %155 : vector<8x128xf32>
    %157 = arith.addf %130, %156 : vector<8x128xf32>
    %c6 = arith.constant 6 : index
    %158 = arith.index_cast %1 : i32 to index
    %c0_78 = arith.constant 0 : index
    %159 = vector.load %arg1[%c6, %158, %c0_78] : memref<8x8x128xf32, #tpu.memory_space<vmem>>, vector<1x8x128xf32>
    %160 = vector.shape_cast %159 : vector<1x8x128xf32> to vector<8x128xf32>
    %c6_79 = arith.constant 6 : index
    %c0_80 = arith.constant 0 : index
    %161 = memref.load %arg2[%c6_79, %c0_80] : memref<8x6xf32, #tpu.memory_space<smem>>
    %162 = vector.broadcast %161 : f32 to vector<8x128xf32>
    %163 = arith.mulf %160, %162 : vector<8x128xf32>
    %164 = arith.addf %137, %163 : vector<8x128xf32>
    %c6_81 = arith.constant 6 : index
    %c1_82 = arith.constant 1 : index
    %165 = memref.load %arg2[%c6_81, %c1_82] : memref<8x6xf32, #tpu.memory_space<smem>>
    %166 = vector.broadcast %165 : f32 to vector<8x128xf32>
    %167 = arith.mulf %160, %166 : vector<8x128xf32>
    %168 = arith.addf %141, %167 : vector<8x128xf32>
    %c6_83 = arith.constant 6 : index
    %c2_84 = arith.constant 2 : index
    %169 = memref.load %arg2[%c6_83, %c2_84] : memref<8x6xf32, #tpu.memory_space<smem>>
    %170 = vector.broadcast %169 : f32 to vector<8x128xf32>
    %171 = arith.mulf %160, %170 : vector<8x128xf32>
    %172 = arith.addf %145, %171 : vector<8x128xf32>
    %c6_85 = arith.constant 6 : index
    %c3_86 = arith.constant 3 : index
    %173 = memref.load %arg2[%c6_85, %c3_86] : memref<8x6xf32, #tpu.memory_space<smem>>
    %174 = vector.broadcast %173 : f32 to vector<8x128xf32>
    %175 = arith.mulf %160, %174 : vector<8x128xf32>
    %176 = arith.addf %149, %175 : vector<8x128xf32>
    %c6_87 = arith.constant 6 : index
    %c4_88 = arith.constant 4 : index
    %177 = memref.load %arg2[%c6_87, %c4_88] : memref<8x6xf32, #tpu.memory_space<smem>>
    %178 = vector.broadcast %177 : f32 to vector<8x128xf32>
    %179 = arith.mulf %160, %178 : vector<8x128xf32>
    %180 = arith.addf %153, %179 : vector<8x128xf32>
    %c6_89 = arith.constant 6 : index
    %c5_90 = arith.constant 5 : index
    %181 = memref.load %arg2[%c6_89, %c5_90] : memref<8x6xf32, #tpu.memory_space<smem>>
    %182 = vector.broadcast %181 : f32 to vector<8x128xf32>
    %183 = arith.mulf %160, %182 : vector<8x128xf32>
    %184 = arith.addf %157, %183 : vector<8x128xf32>
    %c7 = arith.constant 7 : index
    %185 = arith.index_cast %1 : i32 to index
    %c0_91 = arith.constant 0 : index
    %186 = vector.load %arg1[%c7, %185, %c0_91] : memref<8x8x128xf32, #tpu.memory_space<vmem>>, vector<1x8x128xf32>
    %187 = vector.shape_cast %186 : vector<1x8x128xf32> to vector<8x128xf32>
    %c7_92 = arith.constant 7 : index
    %c0_93 = arith.constant 0 : index
    %188 = memref.load %arg2[%c7_92, %c0_93] : memref<8x6xf32, #tpu.memory_space<smem>>
    %189 = vector.broadcast %188 : f32 to vector<8x128xf32>
    %190 = arith.mulf %187, %189 : vector<8x128xf32>
    %191 = arith.addf %164, %190 : vector<8x128xf32>
    %c7_94 = arith.constant 7 : index
    %c1_95 = arith.constant 1 : index
    %192 = memref.load %arg2[%c7_94, %c1_95] : memref<8x6xf32, #tpu.memory_space<smem>>
    %193 = vector.broadcast %192 : f32 to vector<8x128xf32>
    %194 = arith.mulf %187, %193 : vector<8x128xf32>
    %195 = arith.addf %168, %194 : vector<8x128xf32>
    %c7_96 = arith.constant 7 : index
    %c2_97 = arith.constant 2 : index
    %196 = memref.load %arg2[%c7_96, %c2_97] : memref<8x6xf32, #tpu.memory_space<smem>>
    %197 = vector.broadcast %196 : f32 to vector<8x128xf32>
    %198 = arith.mulf %187, %197 : vector<8x128xf32>
    %199 = arith.addf %172, %198 : vector<8x128xf32>
    %c7_98 = arith.constant 7 : index
    %c3_99 = arith.constant 3 : index
    %200 = memref.load %arg2[%c7_98, %c3_99] : memref<8x6xf32, #tpu.memory_space<smem>>
    %201 = vector.broadcast %200 : f32 to vector<8x128xf32>
    %202 = arith.mulf %187, %201 : vector<8x128xf32>
    %203 = arith.addf %176, %202 : vector<8x128xf32>
    %c7_100 = arith.constant 7 : index
    %c4_101 = arith.constant 4 : index
    %204 = memref.load %arg2[%c7_100, %c4_101] : memref<8x6xf32, #tpu.memory_space<smem>>
    %205 = vector.broadcast %204 : f32 to vector<8x128xf32>
    %206 = arith.mulf %187, %205 : vector<8x128xf32>
    %207 = arith.addf %180, %206 : vector<8x128xf32>
    %c7_102 = arith.constant 7 : index
    %c5_103 = arith.constant 5 : index
    %208 = memref.load %arg2[%c7_102, %c5_103] : memref<8x6xf32, #tpu.memory_space<smem>>
    %209 = vector.broadcast %208 : f32 to vector<8x128xf32>
    %210 = arith.mulf %187, %209 : vector<8x128xf32>
    %211 = arith.addf %184, %210 : vector<8x128xf32>
    %c0_104 = arith.constant 0 : index
    %212 = memref.load %arg3[%c0_104] : memref<6xf32, #tpu.memory_space<smem>>
    %213 = vector.broadcast %212 : f32 to vector<8x128xf32>
    %214 = arith.addf %191, %213 : vector<8x128xf32>
    %cst = arith.constant 5.000000e-01 : f32
    %215 = vector.broadcast %cst : f32 to vector<8x128xf32>
    %216 = arith.mulf %215, %214 : vector<8x128xf32>
    %217 = math.tanh %216 : vector<8x128xf32>
    %cst_105 = arith.constant 5.000000e-01 : f32
    %218 = vector.broadcast %cst_105 : f32 to vector<8x128xf32>
    %219 = arith.mulf %218, %217 : vector<8x128xf32>
    %cst_106 = arith.constant 5.000000e-01 : f32
    %220 = vector.broadcast %cst_106 : f32 to vector<8x128xf32>
    %221 = arith.addf %219, %220 : vector<8x128xf32>
    %c1_107 = arith.constant 1 : index
    %222 = memref.load %arg3[%c1_107] : memref<6xf32, #tpu.memory_space<smem>>
    %223 = vector.broadcast %222 : f32 to vector<8x128xf32>
    %224 = arith.addf %195, %223 : vector<8x128xf32>
    %cst_108 = arith.constant 5.000000e-01 : f32
    %225 = vector.broadcast %cst_108 : f32 to vector<8x128xf32>
    %226 = arith.mulf %225, %224 : vector<8x128xf32>
    %227 = math.tanh %226 : vector<8x128xf32>
    %cst_109 = arith.constant 5.000000e-01 : f32
    %228 = vector.broadcast %cst_109 : f32 to vector<8x128xf32>
    %229 = arith.mulf %228, %227 : vector<8x128xf32>
    %cst_110 = arith.constant 5.000000e-01 : f32
    %230 = vector.broadcast %cst_110 : f32 to vector<8x128xf32>
    %231 = arith.addf %229, %230 : vector<8x128xf32>
    %c2_111 = arith.constant 2 : index
    %232 = memref.load %arg3[%c2_111] : memref<6xf32, #tpu.memory_space<smem>>
    %233 = vector.broadcast %232 : f32 to vector<8x128xf32>
    %234 = arith.addf %199, %233 : vector<8x128xf32>
    %cst_112 = arith.constant 5.000000e-01 : f32
    %235 = vector.broadcast %cst_112 : f32 to vector<8x128xf32>
    %236 = arith.mulf %235, %234 : vector<8x128xf32>
    %237 = math.tanh %236 : vector<8x128xf32>
    %cst_113 = arith.constant 5.000000e-01 : f32
    %238 = vector.broadcast %cst_113 : f32 to vector<8x128xf32>
    %239 = arith.mulf %238, %237 : vector<8x128xf32>
    %cst_114 = arith.constant 5.000000e-01 : f32
    %240 = vector.broadcast %cst_114 : f32 to vector<8x128xf32>
    %241 = arith.addf %239, %240 : vector<8x128xf32>
    %c3_115 = arith.constant 3 : index
    %242 = memref.load %arg3[%c3_115] : memref<6xf32, #tpu.memory_space<smem>>
    %243 = vector.broadcast %242 : f32 to vector<8x128xf32>
    %244 = arith.addf %203, %243 : vector<8x128xf32>
    %cst_116 = arith.constant 5.000000e-01 : f32
    %245 = vector.broadcast %cst_116 : f32 to vector<8x128xf32>
    %246 = arith.mulf %245, %244 : vector<8x128xf32>
    %247 = math.tanh %246 : vector<8x128xf32>
    %cst_117 = arith.constant 5.000000e-01 : f32
    %248 = vector.broadcast %cst_117 : f32 to vector<8x128xf32>
    %249 = arith.mulf %248, %247 : vector<8x128xf32>
    %cst_118 = arith.constant 5.000000e-01 : f32
    %250 = vector.broadcast %cst_118 : f32 to vector<8x128xf32>
    %251 = arith.addf %249, %250 : vector<8x128xf32>
    %c4_119 = arith.constant 4 : index
    %252 = memref.load %arg3[%c4_119] : memref<6xf32, #tpu.memory_space<smem>>
    %253 = vector.broadcast %252 : f32 to vector<8x128xf32>
    %254 = arith.addf %207, %253 : vector<8x128xf32>
    %cst_120 = arith.constant 5.000000e-01 : f32
    %255 = vector.broadcast %cst_120 : f32 to vector<8x128xf32>
    %256 = arith.mulf %255, %254 : vector<8x128xf32>
    %257 = math.tanh %256 : vector<8x128xf32>
    %cst_121 = arith.constant 5.000000e-01 : f32
    %258 = vector.broadcast %cst_121 : f32 to vector<8x128xf32>
    %259 = arith.mulf %258, %257 : vector<8x128xf32>
    %cst_122 = arith.constant 5.000000e-01 : f32
    %260 = vector.broadcast %cst_122 : f32 to vector<8x128xf32>
    %261 = arith.addf %259, %260 : vector<8x128xf32>
    %c5_123 = arith.constant 5 : index
    %262 = memref.load %arg3[%c5_123] : memref<6xf32, #tpu.memory_space<smem>>
    %263 = vector.broadcast %262 : f32 to vector<8x128xf32>
    %264 = arith.addf %211, %263 : vector<8x128xf32>
    %cst_124 = arith.constant 5.000000e-01 : f32
    %265 = vector.broadcast %cst_124 : f32 to vector<8x128xf32>
    %266 = arith.mulf %265, %264 : vector<8x128xf32>
    %267 = math.tanh %266 : vector<8x128xf32>
    %cst_125 = arith.constant 5.000000e-01 : f32
    %268 = vector.broadcast %cst_125 : f32 to vector<8x128xf32>
    %269 = arith.mulf %268, %267 : vector<8x128xf32>
    %cst_126 = arith.constant 5.000000e-01 : f32
    %270 = vector.broadcast %cst_126 : f32 to vector<8x128xf32>
    %271 = arith.addf %269, %270 : vector<8x128xf32>
    %c0_127 = arith.constant 0 : index
    %c0_128 = arith.constant 0 : index
    %272 = memref.load %arg4[%c0_127, %c0_128] : memref<6x4xf32, #tpu.memory_space<smem>>
    %273 = vector.broadcast %272 : f32 to vector<8x128xf32>
    %274 = arith.mulf %221, %273 : vector<8x128xf32>
    %c0_129 = arith.constant 0 : index
    %c1_130 = arith.constant 1 : index
    %275 = memref.load %arg4[%c0_129, %c1_130] : memref<6x4xf32, #tpu.memory_space<smem>>
    %276 = vector.broadcast %275 : f32 to vector<8x128xf32>
    %277 = arith.mulf %221, %276 : vector<8x128xf32>
    %c0_131 = arith.constant 0 : index
    %c2_132 = arith.constant 2 : index
    %278 = memref.load %arg4[%c0_131, %c2_132] : memref<6x4xf32, #tpu.memory_space<smem>>
    %279 = vector.broadcast %278 : f32 to vector<8x128xf32>
    %280 = arith.mulf %221, %279 : vector<8x128xf32>
    %c0_133 = arith.constant 0 : index
    %c3_134 = arith.constant 3 : index
    %281 = memref.load %arg4[%c0_133, %c3_134] : memref<6x4xf32, #tpu.memory_space<smem>>
    %282 = vector.broadcast %281 : f32 to vector<8x128xf32>
    %283 = arith.mulf %221, %282 : vector<8x128xf32>
    %c1_135 = arith.constant 1 : index
    %c0_136 = arith.constant 0 : index
    %284 = memref.load %arg4[%c1_135, %c0_136] : memref<6x4xf32, #tpu.memory_space<smem>>
    %285 = vector.broadcast %284 : f32 to vector<8x128xf32>
    %286 = arith.mulf %231, %285 : vector<8x128xf32>
    %287 = arith.addf %274, %286 : vector<8x128xf32>
    %c1_137 = arith.constant 1 : index
    %c1_138 = arith.constant 1 : index
    %288 = memref.load %arg4[%c1_137, %c1_138] : memref<6x4xf32, #tpu.memory_space<smem>>
    %289 = vector.broadcast %288 : f32 to vector<8x128xf32>
    %290 = arith.mulf %231, %289 : vector<8x128xf32>
    %291 = arith.addf %277, %290 : vector<8x128xf32>
    %c1_139 = arith.constant 1 : index
    %c2_140 = arith.constant 2 : index
    %292 = memref.load %arg4[%c1_139, %c2_140] : memref<6x4xf32, #tpu.memory_space<smem>>
    %293 = vector.broadcast %292 : f32 to vector<8x128xf32>
    %294 = arith.mulf %231, %293 : vector<8x128xf32>
    %295 = arith.addf %280, %294 : vector<8x128xf32>
    %c1_141 = arith.constant 1 : index
    %c3_142 = arith.constant 3 : index
    %296 = memref.load %arg4[%c1_141, %c3_142] : memref<6x4xf32, #tpu.memory_space<smem>>
    %297 = vector.broadcast %296 : f32 to vector<8x128xf32>
    %298 = arith.mulf %231, %297 : vector<8x128xf32>
    %299 = arith.addf %283, %298 : vector<8x128xf32>
    %c2_143 = arith.constant 2 : index
    %c0_144 = arith.constant 0 : index
    %300 = memref.load %arg4[%c2_143, %c0_144] : memref<6x4xf32, #tpu.memory_space<smem>>
    %301 = vector.broadcast %300 : f32 to vector<8x128xf32>
    %302 = arith.mulf %241, %301 : vector<8x128xf32>
    %303 = arith.addf %287, %302 : vector<8x128xf32>
    %c2_145 = arith.constant 2 : index
    %c1_146 = arith.constant 1 : index
    %304 = memref.load %arg4[%c2_145, %c1_146] : memref<6x4xf32, #tpu.memory_space<smem>>
    %305 = vector.broadcast %304 : f32 to vector<8x128xf32>
    %306 = arith.mulf %241, %305 : vector<8x128xf32>
    %307 = arith.addf %291, %306 : vector<8x128xf32>
    %c2_147 = arith.constant 2 : index
    %c2_148 = arith.constant 2 : index
    %308 = memref.load %arg4[%c2_147, %c2_148] : memref<6x4xf32, #tpu.memory_space<smem>>
    %309 = vector.broadcast %308 : f32 to vector<8x128xf32>
    %310 = arith.mulf %241, %309 : vector<8x128xf32>
    %311 = arith.addf %295, %310 : vector<8x128xf32>
    %c2_149 = arith.constant 2 : index
    %c3_150 = arith.constant 3 : index
    %312 = memref.load %arg4[%c2_149, %c3_150] : memref<6x4xf32, #tpu.memory_space<smem>>
    %313 = vector.broadcast %312 : f32 to vector<8x128xf32>
    %314 = arith.mulf %241, %313 : vector<8x128xf32>
    %315 = arith.addf %299, %314 : vector<8x128xf32>
    %c3_151 = arith.constant 3 : index
    %c0_152 = arith.constant 0 : index
    %316 = memref.load %arg4[%c3_151, %c0_152] : memref<6x4xf32, #tpu.memory_space<smem>>
    %317 = vector.broadcast %316 : f32 to vector<8x128xf32>
    %318 = arith.mulf %251, %317 : vector<8x128xf32>
    %319 = arith.addf %303, %318 : vector<8x128xf32>
    %c3_153 = arith.constant 3 : index
    %c1_154 = arith.constant 1 : index
    %320 = memref.load %arg4[%c3_153, %c1_154] : memref<6x4xf32, #tpu.memory_space<smem>>
    %321 = vector.broadcast %320 : f32 to vector<8x128xf32>
    %322 = arith.mulf %251, %321 : vector<8x128xf32>
    %323 = arith.addf %307, %322 : vector<8x128xf32>
    %c3_155 = arith.constant 3 : index
    %c2_156 = arith.constant 2 : index
    %324 = memref.load %arg4[%c3_155, %c2_156] : memref<6x4xf32, #tpu.memory_space<smem>>
    %325 = vector.broadcast %324 : f32 to vector<8x128xf32>
    %326 = arith.mulf %251, %325 : vector<8x128xf32>
    %327 = arith.addf %311, %326 : vector<8x128xf32>
    %c3_157 = arith.constant 3 : index
    %c3_158 = arith.constant 3 : index
    %328 = memref.load %arg4[%c3_157, %c3_158] : memref<6x4xf32, #tpu.memory_space<smem>>
    %329 = vector.broadcast %328 : f32 to vector<8x128xf32>
    %330 = arith.mulf %251, %329 : vector<8x128xf32>
    %331 = arith.addf %315, %330 : vector<8x128xf32>
    %c4_159 = arith.constant 4 : index
    %c0_160 = arith.constant 0 : index
    %332 = memref.load %arg4[%c4_159, %c0_160] : memref<6x4xf32, #tpu.memory_space<smem>>
    %333 = vector.broadcast %332 : f32 to vector<8x128xf32>
    %334 = arith.mulf %261, %333 : vector<8x128xf32>
    %335 = arith.addf %319, %334 : vector<8x128xf32>
    %c4_161 = arith.constant 4 : index
    %c1_162 = arith.constant 1 : index
    %336 = memref.load %arg4[%c4_161, %c1_162] : memref<6x4xf32, #tpu.memory_space<smem>>
    %337 = vector.broadcast %336 : f32 to vector<8x128xf32>
    %338 = arith.mulf %261, %337 : vector<8x128xf32>
    %339 = arith.addf %323, %338 : vector<8x128xf32>
    %c4_163 = arith.constant 4 : index
    %c2_164 = arith.constant 2 : index
    %340 = memref.load %arg4[%c4_163, %c2_164] : memref<6x4xf32, #tpu.memory_space<smem>>
    %341 = vector.broadcast %340 : f32 to vector<8x128xf32>
    %342 = arith.mulf %261, %341 : vector<8x128xf32>
    %343 = arith.addf %327, %342 : vector<8x128xf32>
    %c4_165 = arith.constant 4 : index
    %c3_166 = arith.constant 3 : index
    %344 = memref.load %arg4[%c4_165, %c3_166] : memref<6x4xf32, #tpu.memory_space<smem>>
    %345 = vector.broadcast %344 : f32 to vector<8x128xf32>
    %346 = arith.mulf %261, %345 : vector<8x128xf32>
    %347 = arith.addf %331, %346 : vector<8x128xf32>
    %c5_167 = arith.constant 5 : index
    %c0_168 = arith.constant 0 : index
    %348 = memref.load %arg4[%c5_167, %c0_168] : memref<6x4xf32, #tpu.memory_space<smem>>
    %349 = vector.broadcast %348 : f32 to vector<8x128xf32>
    %350 = arith.mulf %271, %349 : vector<8x128xf32>
    %351 = arith.addf %335, %350 : vector<8x128xf32>
    %c5_169 = arith.constant 5 : index
    %c1_170 = arith.constant 1 : index
    %352 = memref.load %arg4[%c5_169, %c1_170] : memref<6x4xf32, #tpu.memory_space<smem>>
    %353 = vector.broadcast %352 : f32 to vector<8x128xf32>
    %354 = arith.mulf %271, %353 : vector<8x128xf32>
    %355 = arith.addf %339, %354 : vector<8x128xf32>
    %c5_171 = arith.constant 5 : index
    %c2_172 = arith.constant 2 : index
    %356 = memref.load %arg4[%c5_171, %c2_172] : memref<6x4xf32, #tpu.memory_space<smem>>
    %357 = vector.broadcast %356 : f32 to vector<8x128xf32>
    %358 = arith.mulf %271, %357 : vector<8x128xf32>
    %359 = arith.addf %343, %358 : vector<8x128xf32>
    %c5_173 = arith.constant 5 : index
    %c3_174 = arith.constant 3 : index
    %360 = memref.load %arg4[%c5_173, %c3_174] : memref<6x4xf32, #tpu.memory_space<smem>>
    %361 = vector.broadcast %360 : f32 to vector<8x128xf32>
    %362 = arith.mulf %271, %361 : vector<8x128xf32>
    %363 = arith.addf %347, %362 : vector<8x128xf32>
    %c0_175 = arith.constant 0 : index
    %364 = memref.load %arg5[%c0_175] : memref<4xf32, #tpu.memory_space<smem>>
    %365 = vector.broadcast %364 : f32 to vector<8x128xf32>
    %366 = arith.addf %351, %365 : vector<8x128xf32>
    %cst_176 = arith.constant 5.000000e-01 : f32
    %367 = vector.broadcast %cst_176 : f32 to vector<8x128xf32>
    %368 = arith.mulf %367, %366 : vector<8x128xf32>
    %369 = math.tanh %368 : vector<8x128xf32>
    %cst_177 = arith.constant 5.000000e-01 : f32
    %370 = vector.broadcast %cst_177 : f32 to vector<8x128xf32>
    %371 = arith.mulf %370, %369 : vector<8x128xf32>
    %cst_178 = arith.constant 5.000000e-01 : f32
    %372 = vector.broadcast %cst_178 : f32 to vector<8x128xf32>
    %373 = arith.addf %371, %372 : vector<8x128xf32>
    %c1_179 = arith.constant 1 : index
    %374 = memref.load %arg5[%c1_179] : memref<4xf32, #tpu.memory_space<smem>>
    %375 = vector.broadcast %374 : f32 to vector<8x128xf32>
    %376 = arith.addf %355, %375 : vector<8x128xf32>
    %cst_180 = arith.constant 5.000000e-01 : f32
    %377 = vector.broadcast %cst_180 : f32 to vector<8x128xf32>
    %378 = arith.mulf %377, %376 : vector<8x128xf32>
    %379 = math.tanh %378 : vector<8x128xf32>
    %cst_181 = arith.constant 5.000000e-01 : f32
    %380 = vector.broadcast %cst_181 : f32 to vector<8x128xf32>
    %381 = arith.mulf %380, %379 : vector<8x128xf32>
    %cst_182 = arith.constant 5.000000e-01 : f32
    %382 = vector.broadcast %cst_182 : f32 to vector<8x128xf32>
    %383 = arith.addf %381, %382 : vector<8x128xf32>
    %c2_183 = arith.constant 2 : index
    %384 = memref.load %arg5[%c2_183] : memref<4xf32, #tpu.memory_space<smem>>
    %385 = vector.broadcast %384 : f32 to vector<8x128xf32>
    %386 = arith.addf %359, %385 : vector<8x128xf32>
    %cst_184 = arith.constant 5.000000e-01 : f32
    %387 = vector.broadcast %cst_184 : f32 to vector<8x128xf32>
    %388 = arith.mulf %387, %386 : vector<8x128xf32>
    %389 = math.tanh %388 : vector<8x128xf32>
    %cst_185 = arith.constant 5.000000e-01 : f32
    %390 = vector.broadcast %cst_185 : f32 to vector<8x128xf32>
    %391 = arith.mulf %390, %389 : vector<8x128xf32>
    %cst_186 = arith.constant 5.000000e-01 : f32
    %392 = vector.broadcast %cst_186 : f32 to vector<8x128xf32>
    %393 = arith.addf %391, %392 : vector<8x128xf32>
    %c3_187 = arith.constant 3 : index
    %394 = memref.load %arg5[%c3_187] : memref<4xf32, #tpu.memory_space<smem>>
    %395 = vector.broadcast %394 : f32 to vector<8x128xf32>
    %396 = arith.addf %363, %395 : vector<8x128xf32>
    %cst_188 = arith.constant 5.000000e-01 : f32
    %397 = vector.broadcast %cst_188 : f32 to vector<8x128xf32>
    %398 = arith.mulf %397, %396 : vector<8x128xf32>
    %399 = math.tanh %398 : vector<8x128xf32>
    %cst_189 = arith.constant 5.000000e-01 : f32
    %400 = vector.broadcast %cst_189 : f32 to vector<8x128xf32>
    %401 = arith.mulf %400, %399 : vector<8x128xf32>
    %cst_190 = arith.constant 5.000000e-01 : f32
    %402 = vector.broadcast %cst_190 : f32 to vector<8x128xf32>
    %403 = arith.addf %401, %402 : vector<8x128xf32>
    %c0_191 = arith.constant 0 : index
    %c0_192 = arith.constant 0 : index
    %404 = memref.load %arg6[%c0_191, %c0_192] : memref<4x1xf32, #tpu.memory_space<smem>>
    %405 = vector.broadcast %404 : f32 to vector<8x128xf32>
    %406 = arith.mulf %373, %405 : vector<8x128xf32>
    %c1_193 = arith.constant 1 : index
    %c0_194 = arith.constant 0 : index
    %407 = memref.load %arg6[%c1_193, %c0_194] : memref<4x1xf32, #tpu.memory_space<smem>>
    %408 = vector.broadcast %407 : f32 to vector<8x128xf32>
    %409 = arith.mulf %383, %408 : vector<8x128xf32>
    %410 = arith.addf %406, %409 : vector<8x128xf32>
    %c2_195 = arith.constant 2 : index
    %c0_196 = arith.constant 0 : index
    %411 = memref.load %arg6[%c2_195, %c0_196] : memref<4x1xf32, #tpu.memory_space<smem>>
    %412 = vector.broadcast %411 : f32 to vector<8x128xf32>
    %413 = arith.mulf %393, %412 : vector<8x128xf32>
    %414 = arith.addf %410, %413 : vector<8x128xf32>
    %c3_197 = arith.constant 3 : index
    %c0_198 = arith.constant 0 : index
    %415 = memref.load %arg6[%c3_197, %c0_198] : memref<4x1xf32, #tpu.memory_space<smem>>
    %416 = vector.broadcast %415 : f32 to vector<8x128xf32>
    %417 = arith.mulf %403, %416 : vector<8x128xf32>
    %418 = arith.addf %414, %417 : vector<8x128xf32>
    %c0_199 = arith.constant 0 : index
    %419 = memref.load %arg7[%c0_199] : memref<1xf32, #tpu.memory_space<smem>>
    %420 = vector.broadcast %419 : f32 to vector<8x128xf32>
    %421 = arith.addf %418, %420 : vector<8x128xf32>
    %cst_200 = arith.constant 5.000000e-01 : f32
    %422 = vector.broadcast %cst_200 : f32 to vector<8x128xf32>
    %423 = arith.mulf %422, %421 : vector<8x128xf32>
    %424 = math.tanh %423 : vector<8x128xf32>
    %cst_201 = arith.constant 5.000000e-01 : f32
    %425 = vector.broadcast %cst_201 : f32 to vector<8x128xf32>
    %426 = arith.mulf %425, %424 : vector<8x128xf32>
    %cst_202 = arith.constant 5.000000e-01 : f32
    %427 = vector.broadcast %cst_202 : f32 to vector<8x128xf32>
    %428 = arith.addf %426, %427 : vector<8x128xf32>
    %429 = arith.index_cast %1 : i32 to index
    %c0_203 = arith.constant 0 : index
    %430 = vector.load %arg8[%429, %c0_203] : memref<8x128xf32, #tpu.memory_space<vmem>>, vector<8x128xf32>
    tpu.vector_store %arg8[%429, %c0_203], %428 {strides = array<i32>} : memref<8x128xf32, #tpu.memory_space<vmem>>, vector<8x128xf32>,
    %c1_i32 = arith.constant 1 : i32
    return
  }
  func.func @transform_0(%arg0: i32) -> (i32, i32, i32) {
    %c0_i32 = arith.constant 0 : i32
    %c0_i32_0 = arith.constant 0 : i32
    %c0_i32_1 = arith.constant 0 : i32
    return %c0_i32, %arg0, %c0_i32_0 : i32, i32, i32
  }
  func.func @transform_1(%arg0: i32) -> (i32, i32) {
    %c0_i32 = arith.constant 0 : i32
    %c0_i32_0 = arith.constant 0 : i32
    %c0_i32_1 = arith.constant 0 : i32
    return %c0_i32, %c0_i32_0 : i32, i32
  }
  func.func @transform_2(%arg0: i32) -> i32 {
    %c0_i32 = arith.constant 0 : i32
    %c0_i32_0 = arith.constant 0 : i32
    return %c0_i32 : i32
  }
  func.func @transform_3(%arg0: i32) -> (i32, i32) {
    %c0_i32 = arith.constant 0 : i32
    %c0_i32_0 = arith.constant 0 : i32
    %c0_i32_1 = arith.constant 0 : i32
    return %c0_i32, %c0_i32_0 : i32, i32
  }
  func.func @transform_4(%arg0: i32) -> i32 {
    %c0_i32 = arith.constant 0 : i32
    %c0_i32_0 = arith.constant 0 : i32
    return %c0_i32 : i32
  }
  func.func @transform_5(%arg0: i32) -> (i32, i32) {
    %c0_i32 = arith.constant 0 : i32
    %c0_i32_0 = arith.constant 0 : i32
    %c0_i32_1 = arith.constant 0 : i32
    return %c0_i32, %c0_i32_0 : i32, i32
  }
  func.func @transform_6(%arg0: i32) -> i32 {
    %c0_i32 = arith.constant 0 : i32
    %c0_i32_0 = arith.constant 0 : i32
    return %c0_i32 : i32
  }
  func.func @transform_7(%arg0: i32) -> (i32, i32) {
    %c0_i32 = arith.constant 0 : i32
    %c0_i32_0 = arith.constant 0 : i32
    return %arg0, %c0_i32 : i32, i32
  }
}

</mosaic_0001>

<llo_original>
// kernel: tpu_custom_call.1
$region0: #{tpu_custom_call.1}
  #allocation0 [shape = 'u32[]', space=smem, size = 0x4, offset = 0x4, fixed_abs, tag = 'smem constant byte address 0x4 - core index']
  #allocation1 [shape = 'u32[144,128]{1,0:T(1,128)}', space=vmem, size = 0x12000, scoped, tag = 'internal scratch']
  #allocation2 [shape = 'f32[1]{0:T(128)S(6)}', space=smem, size = 0x200, scoped, tag = 'scoped memory for tpu_custom_call.1']
  %s0 = inlined_call_operand.hbm [shape: f32[8,8,128], index: 0, kind: input, shape index: {}]
  %s1 = inlined_call_operand.vmem [shape: f32[8,6], index: 1, kind: input, shape index: {}]
  %s2 = inlined_call_operand.vmem [shape: f32[6], index: 2, kind: input, shape index: {}]
  %s3 = inlined_call_operand.vmem [shape: f32[6,4], index: 3, kind: input, shape index: {}]
  %s4 = inlined_call_operand.vmem [shape: f32[4], index: 4, kind: input, shape index: {}]
  %s5 = inlined_call_operand.vmem [shape: f32[4,1], index: 5, kind: input, shape index: {}]
  %s6 = inlined_call_operand.<no memory space> [shape: f32[1], index: 6, kind: input, shape index: {}]
  %s7 = inlined_call_operand.hbm [shape: f32[8,128], index: 7, kind: output, shape index: {}]
  %s8 = sld [smem:[#allocation0]]
  $region62: #{tpu_custom_call.1} parent=0
    _
  %s10 = ssub.s32 1, %s8
  %s11 = scalar_select 0, %s10, %s8
  %12 = sst [smem:[#allocation2]] %s6
  $region1: #{tpu_custom_call.1} parent=0
    #allocation3 [shape = 'u8[32768]{0}', space=vmem, size = 0x8000, scoped, tag = 'input window, operand 0, single buffered']
    #allocation4 [shape = 's32[1]{0}', space=sflag, size = 0x4, scoped, tag = 'scoped memory for tpu_custom_call.1']
    #allocation5 [shape = 's32[1]{0}', space=sflag, size = 0x4, scoped, tag = 'scoped memory for tpu_custom_call.1']
    #allocation6 [shape = 's32[1]{0}', space=sflag, size = 0x4, scoped, tag = 'scoped memory for tpu_custom_call.1']
    #allocation7 [shape = 'u8[4096]{0}', space=smem, size = 0x1000, scoped, tag = 'input window, operand 1, single buffered']
    #allocation8 [shape = 'u8[512]{0}', space=smem, size = 0x200, scoped, tag = 'input window, operand 2, single buffered']
    #allocation9 [shape = 's32[1]{0}', space=sflag, size = 0x4, scoped, tag = 'scoped memory for tpu_custom_call.1']
    #allocation10 [shape = 'u8[4096]{0}', space=smem, size = 0x1000, scoped, tag = 'input window, operand 3, single buffered']
    #allocation11 [shape = 'u8[512]{0}', space=smem, size = 0x200, scoped, tag = 'input window, operand 4, single buffered']
    #allocation12 [shape = 's32[1]{0}', space=sflag, size = 0x4, scoped, tag = 'scoped memory for tpu_custom_call.1']
    #allocation13 [shape = 'u8[2048]{0}', space=smem, size = 0x800, scoped, tag = 'input window, operand 5, single buffered']
    #allocation14 [shape = 'u8[4096]{0}', space=vmem, size = 0x1000, scoped, tag = 'output window, operand 0, single buffered']
    %13 = vsyncpa [#allocation4], 0
    %14 = vsyncpa [#allocation6], 0
    %15 = vsyncpa [#allocation9], 0
    %16 = vsyncpa [#allocation12], 0
    %17 = vsyncpa [#allocation5], 0
    // Predicated region
    $region2: #{tpu_custom_call.1} parent=1 // pred_check
      _
    $region3: #{tpu_custom_call.1} parent=1 // pred_check_branch
      %19 = sbr.rel (0) target = $region5
    $region4: #{tpu_custom_call.1} parent=1 // pred_region
      %s21 = ssub.s32 1024, 1024
      %22 = vsyncadd [#allocation4], %s21
      %s23 = sshll.u32 [#allocation3], 4
      %s24 = int_to_ptr.vmem [resolvable:$true] %s23
      %29 = dma.hbm_to_vmem [thread:$0]  %s0, 1024, %s24, [#allocation4], 128, 128, 8
    $region5: #{tpu_custom_call.1} parent=1 // pred_fallthru
      _
    // Predicated region
    $region6: #{tpu_custom_call.1} parent=1 // pred_check
      _
    $region7: #{tpu_custom_call.1} parent=1 // pred_check_branch
      %31 = sbr.rel (0) target = $region9
    $region8: #{tpu_custom_call.1} parent=1 // pred_region
      %s33 = ssub.s32 128, 128
      %34 = vsyncadd [#allocation6], %s33
      %s36 = sshll.u32 %s1, 4
      %s37 = int_to_ptr.vmem [resolvable:$true] %s36
      %39 = dma.vmem_to_smem %s37, 128, [#allocation7], [#allocation6]
    $region9: #{tpu_custom_call.1} parent=1 // pred_fallthru
      _
    // Predicated region
    $region10: #{tpu_custom_call.1} parent=1 // pred_check
      _
    $region11: #{tpu_custom_call.1} parent=1 // pred_check_branch
      %41 = sbr.rel (0) target = $region13
    $region12: #{tpu_custom_call.1} parent=1 // pred_region
      %s43 = ssub.s32 16, 16
      %44 = vsyncadd [#allocation9], %s43
      %s46 = sshll.u32 %s2, 4
      %s47 = int_to_ptr.vmem [resolvable:$true] %s46
      %49 = dma.vmem_to_smem %s47, 16, [#allocation8], [#allocation9]
    $region13: #{tpu_custom_call.1} parent=1 // pred_fallthru
      _
    // Predicated region
    $region14: #{tpu_custom_call.1} parent=1 // pred_check
      _
    $region15: #{tpu_custom_call.1} parent=1 // pred_check_branch
      %51 = sbr.rel (0) target = $region17
    $region16: #{tpu_custom_call.1} parent=1 // pred_region
      %s53 = ssub.s32 128, 128
      %54 = vsyncadd [#allocation9], %s53
      %s56 = sshll.u32 %s3, 4
      %s57 = int_to_ptr.vmem [resolvable:$true] %s56
      %59 = dma.vmem_to_smem %s57, 128, [#allocation10], [#allocation9]
    $region17: #{tpu_custom_call.1} parent=1 // pred_fallthru
      _
    // Predicated region
    $region18: #{tpu_custom_call.1} parent=1 // pred_check
      _
    $region19: #{tpu_custom_call.1} parent=1 // pred_check_branch
      %61 = sbr.rel (0) target = $region21
    $region20: #{tpu_custom_call.1} parent=1 // pred_region
      %s63 = ssub.s32 16, 16
      %64 = vsyncadd [#allocation12], %s63
      %s66 = sshll.u32 %s4, 4
      %s67 = int_to_ptr.vmem [resolvable:$true] %s66
      %69 = dma.vmem_to_smem %s67, 16, [#allocation11], [#allocation12]
    $region21: #{tpu_custom_call.1} parent=1 // pred_fallthru
      _
    // Predicated region
    $region22: #{tpu_custom_call.1} parent=1 // pred_check
      _
    $region23: #{tpu_custom_call.1} parent=1 // pred_check_branch
      %71 = sbr.rel (0) target = $region25
    $region24: #{tpu_custom_call.1} parent=1 // pred_region
      %s73 = ssub.s32 64, 64
      %74 = vsyncadd [#allocation12], %s73
      %s76 = sshll.u32 %s5, 4
      %s77 = int_to_ptr.vmem [resolvable:$true] %s76
      %79 = dma.vmem_to_smem %s77, 64, [#allocation13], [#allocation12]
    $region25: #{tpu_custom_call.1} parent=1 // pred_fallthru
      _
    // Predicated region
    $region26: #{tpu_custom_call.1} parent=1 // pred_check
      _
    $region27: #{tpu_custom_call.1} parent=1 // pred_check_branch
      %81 = sbr.rel (0) target = $region29
    $region28: #{tpu_custom_call.1} parent=1 // pred_region
      _
    $region29: #{tpu_custom_call.1} parent=1 // pred_fallthru
      _
    // Predicated region
    $region30: #{tpu_custom_call.1} parent=1 // pred_check
      _
    $region31: #{tpu_custom_call.1} parent=1 // pred_check_branch
      %83 = sbr.rel (0) target = $region33
    $region32: #{tpu_custom_call.1} parent=1 // pred_region
      %84 = dma.done [#allocation4], 1024
    $region33: #{tpu_custom_call.1} parent=1 // pred_fallthru
      _
    // Predicated region
    $region34: #{tpu_custom_call.1} parent=1 // pred_check
      _
    $region35: #{tpu_custom_call.1} parent=1 // pred_check_branch
      %86 = sbr.rel (0) target = $region37
    $region36: #{tpu_custom_call.1} parent=1 // pred_region
      %87 = dma.done [#allocation6], 128
    $region37: #{tpu_custom_call.1} parent=1 // pred_fallthru
      _
    // Predicated region
    $region38: #{tpu_custom_call.1} parent=1 // pred_check
      _
    $region39: #{tpu_custom_call.1} parent=1 // pred_check_branch
      %89 = sbr.rel (0) target = $region41
    $region40: #{tpu_custom_call.1} parent=1 // pred_region
      %90 = dma.done [#allocation9], 16
    $region41: #{tpu_custom_call.1} parent=1 // pred_fallthru
      _
    // Predicated region
    $region42: #{tpu_custom_call.1} parent=1 // pred_check
      _
    $region43: #{tpu_custom_call.1} parent=1 // pred_check_branch
      %92 = sbr.rel (0) target = $region45
    $region44: #{tpu_custom_call.1} parent=1 // pred_region
      %93 = dma.done [#allocation9], 128
    $region45: #{tpu_custom_call.1} parent=1 // pred_fallthru
      _
    // Predicated region
    $region46: #{tpu_custom_call.1} parent=1 // pred_check
      _
    $region47: #{tpu_custom_call.1} parent=1 // pred_check_branch
      %95 = sbr.rel (0) target = $region49
    $region48: #{tpu_custom_call.1} parent=1 // pred_region
      %96 = dma.done [#allocation12], 16
    $region49: #{tpu_custom_call.1} parent=1 // pred_fallthru
      _
    // Predicated region
    $region50: #{tpu_custom_call.1} parent=1 // pred_check
      _
    $region51: #{tpu_custom_call.1} parent=1 // pred_check_branch
      %98 = sbr.rel (0) target = $region53
    $region52: #{tpu_custom_call.1} parent=1 // pred_region
      %99 = dma.done [#allocation12], 64
    $region53: #{tpu_custom_call.1} parent=1 // pred_fallthru
      _
    %100 = sfence
    %v101 = vld [vmem:[#allocation3] sm:$0xff]
    %s102 = sld [smem:[#allocation7]]
    %v103 = vstv %s102
    %v104 = vmul.f32 %v101, %v103
    %s105 = sld [smem:[#allocation7 + $0x1]]
    %v106 = vstv %s105
    %v107 = vmul.f32 %v101, %v106
    %s108 = sld [smem:[#allocation7 + $0x2]]
    %v109 = vstv %s108
    %v110 = vmul.f32 %v101, %v109
    %s111 = sld [smem:[#allocation7 + $0x3]]
    %v112 = vstv %s111
    %v113 = vmul.f32 %v101, %v112
    %s114 = sld [smem:[#allocation7 + $0x4]]
    %v115 = vstv %s114
    %v116 = vmul.f32 %v101, %v115
    %s117 = sld [smem:[#allocation7 + $0x5]]
    %v118 = vstv %s117
    %v119 = vmul.f32 %v101, %v118
    %s120 = sadd.s32 0, 8
    %s121 = scalar_lea.vmem [#allocation3], %s120
    %v122 = vld [vmem:[%s121] sm:$0xff]
    %s123 = sld [smem:[#allocation7 + $0x80]]
    %v124 = vstv %s123
    %v125 = vmul.f32 %v122, %v124
    %v126 = vadd.f32 %v104, %v125
    %s127 = sld [smem:[#allocation7 + $0x81]]
    %v128 = vstv %s127
    %v129 = vmul.f32 %v122, %v128
    %v130 = vadd.f32 %v107, %v129
    %s131 = sld [smem:[#allocation7 + $0x82]]
    %v132 = vstv %s131
    %v133 = vmul.f32 %v122, %v132
    %v134 = vadd.f32 %v110, %v133
    %s135 = sld [smem:[#allocation7 + $0x83]]
    %v136 = vstv %s135
    %v137 = vmul.f32 %v122, %v136
    %v138 = vadd.f32 %v113, %v137
    %s139 = sld [smem:[#allocation7 + $0x84]]
    %v140 = vstv %s139
    %v141 = vmul.f32 %v122, %v140
    %v142 = vadd.f32 %v116, %v141
    %s143 = sld [smem:[#allocation7 + $0x85]]
    %v144 = vstv %s143
    %v145 = vmul.f32 %v122, %v144
    %v146 = vadd.f32 %v119, %v145
    %s147 = sadd.s32 0, 16
    %s148 = scalar_lea.vmem [#allocation3], %s147
    %v149 = vld [vmem:[%s148] sm:$0xff]
    %s150 = sld [smem:[#allocation7 + $0x100]]
    %v151 = vstv %s150
    %v152 = vmul.f32 %v149, %v151
    %v153 = vadd.f32 %v126, %v152
    %s154 = sld [smem:[#allocation7 + $0x101]]
    %v155 = vstv %s154
    %v156 = vmul.f32 %v149, %v155
    %v157 = vadd.f32 %v130, %v156
    %s158 = sld [smem:[#allocation7 + $0x102]]
    %v159 = vstv %s158
    %v160 = vmul.f32 %v149, %v159
    %v161 = vadd.f32 %v134, %v160
    %s162 = sld [smem:[#allocation7 + $0x103]]
    %v163 = vstv %s162
    %v164 = vmul.f32 %v149, %v163
    %v165 = vadd.f32 %v138, %v164
    %s166 = sld [smem:[#allocation7 + $0x104]]
    %v167 = vstv %s166
    %v168 = vmul.f32 %v149, %v167
    %v169 = vadd.f32 %v142, %v168
    %s170 = sld [smem:[#allocation7 + $0x105]]
    %v171 = vstv %s170
    %v172 = vmul.f32 %v149, %v171
    %v173 = vadd.f32 %v146, %v172
    %s174 = sadd.s32 0, 24
    %s175 = scalar_lea.vmem [#allocation3], %s174
    %v176 = vld [vmem:[%s175] sm:$0xff]
    %s177 = sld [smem:[#allocation7 + $0x180]]
    %v178 = vstv %s177
    %v179 = vmul.f32 %v176, %v178
    %v180 = vadd.f32 %v153, %v179
    %s181 = sld [smem:[#allocation7 + $0x181]]
    %v182 = vstv %s181
    %v183 = vmul.f32 %v176, %v182
    %v184 = vadd.f32 %v157, %v183
    %s185 = sld [smem:[#allocation7 + $0x182]]
    %v186 = vstv %s185
    %v187 = vmul.f32 %v176, %v186
    %v188 = vadd.f32 %v161, %v187
    %s189 = sld [smem:[#allocation7 + $0x183]]
    %v190 = vstv %s189
    %v191 = vmul.f32 %v176, %v190
    %v192 = vadd.f32 %v165, %v191
    %s193 = sld [smem:[#allocation7 + $0x184]]
    %v194 = vstv %s193
    %v195 = vmul.f32 %v176, %v194
    %v196 = vadd.f32 %v169, %v195
    %s197 = sld [smem:[#allocation7 + $0x185]]
    %v198 = vstv %s197
    %v199 = vmul.f32 %v176, %v198
    %v200 = vadd.f32 %v173, %v199
    %s201 = sadd.s32 0, 32
    %s202 = scalar_lea.vmem [#allocation3], %s201
    %v203 = vld [vmem:[%s202] sm:$0xff]
    %s204 = sld [smem:[#allocation7 + $0x200]]
    %v205 = vstv %s204
    %v206 = vmul.f32 %v203, %v205
    %v207 = vadd.f32 %v180, %v206
    %s208 = sld [smem:[#allocation7 + $0x201]]
    %v209 = vstv %s208
    %v210 = vmul.f32 %v203, %v209
    %v211 = vadd.f32 %v184, %v210
    %s212 = sld [smem:[#allocation7 + $0x202]]
    %v213 = vstv %s212
    %v214 = vmul.f32 %v203, %v213
    %v215 = vadd.f32 %v188, %v214
    %s216 = sld [smem:[#allocation7 + $0x203]]
    %v217 = vstv %s216
    %v218 = vmul.f32 %v203, %v217
    %v219 = vadd.f32 %v192, %v218
    %s220 = sld [smem:[#allocation7 + $0x204]]
    %v221 = vstv %s220
    %v222 = vmul.f32 %v203, %v221
    %v223 = vadd.f32 %v196, %v222
    %s224 = sld [smem:[#allocation7 + $0x205]]
    %v225 = vstv %s224
    %v226 = vmul.f32 %v203, %v225
    %v227 = vadd.f32 %v200, %v226
    %s228 = sadd.s32 0, 40
    %s229 = scalar_lea.vmem [#allocation3], %s228
    %v230 = vld [vmem:[%s229] sm:$0xff]
    %s231 = sld [smem:[#allocation7 + $0x280]]
    %v232 = vstv %s231
    %v233 = vmul.f32 %v230, %v232
    %v234 = vadd.f32 %v207, %v233
    %s235 = sld [smem:[#allocation7 + $0x281]]
    %v236 = vstv %s235
    %v237 = vmul.f32 %v230, %v236
    %v238 = vadd.f32 %v211, %v237
    %s239 = sld [smem:[#allocation7 + $0x282]]
    %v240 = vstv %s239
    %v241 = vmul.f32 %v230, %v240
    %v242 = vadd.f32 %v215, %v241
    %s243 = sld [smem:[#allocation7 + $0x283]]
    %v244 = vstv %s243
    %v245 = vmul.f32 %v230, %v244
    %v246 = vadd.f32 %v219, %v245
    %s247 = sld [smem:[#allocation7 + $0x284]]
    %v248 = vstv %s247
    %v249 = vmul.f32 %v230, %v248
    %v250 = vadd.f32 %v223, %v249
    %s251 = sld [smem:[#allocation7 + $0x285]]
    %v252 = vstv %s251
    %v253 = vmul.f32 %v230, %v252
    %v254 = vadd.f32 %v227, %v253
    %s255 = sadd.s32 0, 48
    %s256 = scalar_lea.vmem [#allocation3], %s255
    %v257 = vld [vmem:[%s256] sm:$0xff]
    %s258 = sld [smem:[#allocation7 + $0x300]]
    %v259 = vstv %s258
    %v260 = vmul.f32 %v257, %v259
    %v261 = vadd.f32 %v234, %v260
    %s262 = sld [smem:[#allocation7 + $0x301]]
    %v263 = vstv %s262
    %v264 = vmul.f32 %v257, %v263
    %v265 = vadd.f32 %v238, %v264
    %s266 = sld [smem:[#allocation7 + $0x302]]
    %v267 = vstv %s266
    %v268 = vmul.f32 %v257, %v267
    %v269 = vadd.f32 %v242, %v268
    %s270 = sld [smem:[#allocation7 + $0x303]]
    %v271 = vstv %s270
    %v272 = vmul.f32 %v257, %v271
    %v273 = vadd.f32 %v246, %v272
    %s274 = sld [smem:[#allocation7 + $0x304]]
    %v275 = vstv %s274
    %v276 = vmul.f32 %v257, %v275
    %v277 = vadd.f32 %v250, %v276
    %s278 = sld [smem:[#allocation7 + $0x305]]
    %v279 = vstv %s278
    %v280 = vmul.f32 %v257, %v279
    %v281 = vadd.f32 %v254, %v280
    %s282 = sadd.s32 0, 56
    %s283 = scalar_lea.vmem [#allocation3], %s282
    %v284 = vld [vmem:[%s283] sm:$0xff]
    %s285 = sld [smem:[#allocation7 + $0x380]]
    %v286 = vstv %s285
    %v287 = vmul.f32 %v284, %v286
    %v288 = vadd.f32 %v261, %v287
    %s289 = sld [smem:[#allocation7 + $0x381]]
    %v290 = vstv %s289
    %v291 = vmul.f32 %v284, %v290
    %v292 = vadd.f32 %v265, %v291
    %s293 = sld [smem:[#allocation7 + $0x382]]
    %v294 = vstv %s293
    %v295 = vmul.f32 %v284, %v294
    %v296 = vadd.f32 %v269, %v295
    %s297 = sld [smem:[#allocation7 + $0x383]]
    %v298 = vstv %s297
    %v299 = vmul.f32 %v284, %v298
    %v300 = vadd.f32 %v273, %v299
    %s301 = sld [smem:[#allocation7 + $0x384]]
    %v302 = vstv %s301
    %v303 = vmul.f32 %v284, %v302
    %v304 = vadd.f32 %v277, %v303
    %s305 = sld [smem:[#allocation7 + $0x385]]
    %v306 = vstv %s305
    %v307 = vmul.f32 %v284, %v306
    %v308 = vadd.f32 %v281, %v307
    %s309 = sld [smem:[#allocation8]]
    %v310 = vstv %s309
    %v311 = vadd.f32 %v288, %v310
    %v312 = vmul.f32 %v311, 0.5
    %v313 = vtanh.pop %v312
    %v314 = vmul.f32 %v313, 0.5
    %v315 = vadd.f32 %v314, 0.5
    %s316 = sld [smem:[#allocation8 + $0x1]]
    %v317 = vstv %s316
    %v318 = vadd.f32 %v292, %v317
    %v319 = vmul.f32 %v318, 0.5
    %v320 = vtanh.pop %v319
    %v321 = vmul.f32 %v320, 0.5
    %v322 = vadd.f32 %v321, 0.5
    %s323 = sld [smem:[#allocation8 + $0x2]]
    %v324 = vstv %s323
    %v325 = vadd.f32 %v296, %v324
    %v326 = vmul.f32 %v325, 0.5
    %v327 = vtanh.pop %v326
    %v328 = vmul.f32 %v327, 0.5
    %v329 = vadd.f32 %v328, 0.5
    %s330 = sld [smem:[#allocation8 + $0x3]]
    %v331 = vstv %s330
    %v332 = vadd.f32 %v300, %v331
    %v333 = vmul.f32 %v332, 0.5
    %v334 = vtanh.pop %v333
    %v335 = vmul.f32 %v334, 0.5
    %v336 = vadd.f32 %v335, 0.5
    %s337 = sld [smem:[#allocation8 + $0x4]]
    %v338 = vstv %s337
    %v339 = vadd.f32 %v304, %v338
    %v340 = vmul.f32 %v339, 0.5
    %v341 = vtanh.pop %v340
    %v342 = vmul.f32 %v341, 0.5
    %v343 = vadd.f32 %v342, 0.5
    %s344 = sld [smem:[#allocation8 + $0x5]]
    %v345 = vstv %s344
    %v346 = vadd.f32 %v308, %v345
    %v347 = vmul.f32 %v346, 0.5
    %v348 = vtanh.pop %v347
    %v349 = vmul.f32 %v348, 0.5
    %v350 = vadd.f32 %v349, 0.5
    %s351 = sld [smem:[#allocation10]]
    %v352 = vstv %s351
    %v353 = vmul.f32 %v315, %v352
    %s354 = sld [smem:[#allocation10 + $0x1]]
    %v355 = vstv %s354
    %v356 = vmul.f32 %v315, %v355
    %s357 = sld [smem:[#allocation10 + $0x2]]
    %v358 = vstv %s357
    %v359 = vmul.f32 %v315, %v358
    %s360 = sld [smem:[#allocation10 + $0x3]]
    %v361 = vstv %s360
    %v362 = vmul.f32 %v315, %v361
    %s363 = sld [smem:[#allocation10 + $0x80]]
    %v364 = vstv %s363
    %v365 = vmul.f32 %v322, %v364
    %v366 = vadd.f32 %v353, %v365
    %s367 = sld [smem:[#allocation10 + $0x81]]
    %v368 = vstv %s367
    %v369 = vmul.f32 %v322, %v368
    %v370 = vadd.f32 %v356, %v369
    %s371 = sld [smem:[#allocation10 + $0x82]]
    %v372 = vstv %s371
    %v373 = vmul.f32 %v322, %v372
    %v374 = vadd.f32 %v359, %v373
    %s375 = sld [smem:[#allocation10 + $0x83]]
    %v376 = vstv %s375
    %v377 = vmul.f32 %v322, %v376
    %v378 = vadd.f32 %v362, %v377
    %s379 = sld [smem:[#allocation10 + $0x100]]
    %v380 = vstv %s379
    %v381 = vmul.f32 %v329, %v380
    %v382 = vadd.f32 %v366, %v381
    %s383 = sld [smem:[#allocation10 + $0x101]]
    %v384 = vstv %s383
    %v385 = vmul.f32 %v329, %v384
    %v386 = vadd.f32 %v370, %v385
    %s387 = sld [smem:[#allocation10 + $0x102]]
    %v388 = vstv %s387
    %v389 = vmul.f32 %v329, %v388
    %v390 = vadd.f32 %v374, %v389
    %s391 = sld [smem:[#allocation10 + $0x103]]
    %v392 = vstv %s391
    %v393 = vmul.f32 %v329, %v392
    %v394 = vadd.f32 %v378, %v393
    %s395 = sld [smem:[#allocation10 + $0x180]]
    %v396 = vstv %s395
    %v397 = vmul.f32 %v336, %v396
    %v398 = vadd.f32 %v382, %v397
    %s399 = sld [smem:[#allocation10 + $0x181]]
    %v400 = vstv %s399
    %v401 = vmul.f32 %v336, %v400
    %v402 = vadd.f32 %v386, %v401
    %s403 = sld [smem:[#allocation10 + $0x182]]
    %v404 = vstv %s403
    %v405 = vmul.f32 %v336, %v404
    %v406 = vadd.f32 %v390, %v405
    %s407 = sld [smem:[#allocation10 + $0x183]]
    %v408 = vstv %s407
    %v409 = vmul.f32 %v336, %v408
    %v410 = vadd.f32 %v394, %v409
    %s411 = sld [smem:[#allocation10 + $0x200]]
    %v412 = vstv %s411
    %v413 = vmul.f32 %v343, %v412
    %v414 = vadd.f32 %v398, %v413
    %s415 = sld [smem:[#allocation10 + $0x201]]
    %v416 = vstv %s415
    %v417 = vmul.f32 %v343, %v416
    %v418 = vadd.f32 %v402, %v417
    %s419 = sld [smem:[#allocation10 + $0x202]]
    %v420 = vstv %s419
    %v421 = vmul.f32 %v343, %v420
    %v422 = vadd.f32 %v406, %v421
    %s423 = sld [smem:[#allocation10 + $0x203]]
    %v424 = vstv %s423
    %v425 = vmul.f32 %v343, %v424
    %v426 = vadd.f32 %v410, %v425
    %s427 = sld [smem:[#allocation10 + $0x280]]
    %v428 = vstv %s427
    %v429 = vmul.f32 %v350, %v428
    %v430 = vadd.f32 %v414, %v429
    %s431 = sld [smem:[#allocation10 + $0x281]]
    %v432 = vstv %s431
    %v433 = vmul.f32 %v350, %v432
    %v434 = vadd.f32 %v418, %v433
    %s435 = sld [smem:[#allocation10 + $0x282]]
    %v436 = vstv %s435
    %v437 = vmul.f32 %v350, %v436
    %v438 = vadd.f32 %v422, %v437
    %s439 = sld [smem:[#allocation10 + $0x283]]
    %v440 = vstv %s439
    %v441 = vmul.f32 %v350, %v440
    %v442 = vadd.f32 %v426, %v441
    %s443 = sld [smem:[#allocation11]]
    %v444 = vstv %s443
    %v445 = vadd.f32 %v430, %v444
    %v446 = vmul.f32 %v445, 0.5
    %v447 = vtanh.pop %v446
    %v448 = vmul.f32 %v447, 0.5
    %v449 = vadd.f32 %v448, 0.5
    %s450 = sld [smem:[#allocation11 + $0x1]]
    %v451 = vstv %s450
    %v452 = vadd.f32 %v434, %v451
    %v453 = vmul.f32 %v452, 0.5
    %v454 = vtanh.pop %v453
    %v455 = vmul.f32 %v454, 0.5
    %v456 = vadd.f32 %v455, 0.5
    %s457 = sld [smem:[#allocation11 + $0x2]]
    %v458 = vstv %s457
    %v459 = vadd.f32 %v438, %v458
    %v460 = vmul.f32 %v459, 0.5
    %v461 = vtanh.pop %v460
    %v462 = vmul.f32 %v461, 0.5
    %v463 = vadd.f32 %v462, 0.5
    %s464 = sld [smem:[#allocation11 + $0x3]]
    %v465 = vstv %s464
    %v466 = vadd.f32 %v442, %v465
    %v467 = vmul.f32 %v466, 0.5
    %v468 = vtanh.pop %v467
    %v469 = vmul.f32 %v468, 0.5
    %v470 = vadd.f32 %v469, 0.5
    %s471 = sld [smem:[#allocation13]]
    %v472 = vstv %s471
    %v473 = vmul.f32 %v449, %v472
    %s474 = sld [smem:[#allocation13 + $0x80]]
    %v475 = vstv %s474
    %v476 = vmul.f32 %v456, %v475
    %v477 = vadd.f32 %v473, %v476
    %s478 = sld [smem:[#allocation13 + $0x100]]
    %v479 = vstv %s478
    %v480 = vmul.f32 %v463, %v479
    %v481 = vadd.f32 %v477, %v480
    %s482 = sld [smem:[#allocation13 + $0x180]]
    %v483 = vstv %s482
    %v484 = vmul.f32 %v470, %v483
    %v485 = vadd.f32 %v481, %v484
    %s486 = sld [smem:[#allocation2]]
    %v487 = vstv %s486
    %v488 = vadd.f32 %v485, %v487
    %v489 = vmul.f32 %v488, 0.5
    %v490 = vtanh.pop %v489
    %v491 = vmul.f32 %v490, 0.5
    %v492 = vadd.f32 %v491, 0.5
    %493 = vst [vmem:[#allocation14] sm:$0xff] %v492
    // Predicated region
    $region54: #{tpu_custom_call.1} parent=1 // pred_check
      _
    $region55: #{tpu_custom_call.1} parent=1 // pred_check_branch
      %495 = sbr.rel (0) target = $region57
    $region56: #{tpu_custom_call.1} parent=1 // pred_region
      %s497 = ssub.s32 128, 128
      %498 = vsyncadd [#allocation5], %s497
      %s500 = sshll.u32 [#allocation14], 4
      %s501 = int_to_ptr.vmem [resolvable:$true] %s500
      %503 = dma.vmem_to_hbm [thread:$0]  %s501, 128, %s7, [#allocation5]
    $region57: #{tpu_custom_call.1} parent=1 // pred_fallthru
      _
    // Predicated region
    $region58: #{tpu_custom_call.1} parent=1 // pred_check
      _
    $region59: #{tpu_custom_call.1} parent=1 // pred_check_branch
      %505 = sbr.rel (0) target = $region61
    $region60: #{tpu_custom_call.1} parent=1 // pred_region
      %506 = dma.done [#allocation5], 128
    $region61: #{tpu_custom_call.1} parent=1 // pred_fallthru
      _
    %507 = vsyncpa [#allocation4], 1
    %508 = vsyncpa [#allocation5], 1
    %509 = vsyncpa [#allocation6], 1
    %510 = vsyncpa [#allocation9], 1
    %511 = vsyncpa [#allocation12], 1

</llo_original>
